<compile_context>
chip_gen: v6e
topology: v6e:2x2x1
jax: 0.10.0
libtpu: 0.0.40
codegen_flags: <defaults>
</compile_context>

<pallas_src>
import functools
import math

import jax
import jax.numpy as jnp
from jax.experimental import pallas as pl
from jax.experimental.pallas import tpu as pltpu

_INV_SQRT2 = 1.0 / math.sqrt(2.0)
_TANH_C = math.sqrt(2.0 / math.pi)


def _round_up(x, m):
    return ((x + m - 1) // m) * m


def _sublane(dtype):
    # Sublane granularity of the second-to-last dim for a given dtype.
    return max(8, 32 // jnp.dtype(dtype).itemsize)


def _vmem_capacity_bytes():
    # v7x: 64 MiB per TensorCore; v5e/v6e: 128 MiB.  Query at trace time and
    # fall back to the conservative (v7x) figure if the query fails.
    try:
        cap = getattr(pltpu.get_tpu_info(), "vmem_capacity_bytes", None)
        if cap:
            return int(cap)
    except Exception:
        pass
    return 64 * 1024 * 1024


def _bert_intermediate_kernel(x_ref, w_ref, b_ref, o_ref, *, mm_dtype, gelu_impl):
    # x_ref: (tm, H) in the caller's activation dtype.  The bf16 cast happens
    # HERE (VPU work hidden under the MXU) so the wrapper never materializes
    # an extra bf16 copy of the big [M, H] activation stream in HBM.
    x = x_ref[...].astype(mm_dtype)
    y = jnp.dot(x, w_ref[...], preferred_element_type=jnp.float32)
    y = y + b_ref[...].astype(jnp.float32)           # bias broadcast over tokens
    if gelu_impl == "tanh":
        # Opt-in tanh approximation: the transcendental goes to the EUP slot,
        # relieving the VALU on v6e/v7x.  NOT bit-identical to torch's erf GeLU.
        y = 0.5 * y * (1.0 + jnp.tanh(jnp.float32(_TANH_C)
                                      * (y + jnp.float32(0.044715) * y * y * y)))
    else:
        # Exact erf-based GeLU — matches the PyTorch reference:
        #   x * 0.5 * (1 + erf(x / sqrt(2)))
        y = y * 0.5 * (1.0 + jax.lax.erf(y * jnp.float32(_INV_SQRT2)))
    o_ref[...] = y.astype(o_ref.dtype)


def bert_intermediate(hidden_states, weight, bias, *, tm=512, tn=None,
                      use_bf16_matmul=True, gelu_impl="erf", out_dtype=None):
    """BertIntermediate forward.

    hidden_states: (B, S, H)
    weight:        (H, I)   -- transpose of PyTorch nn.Linear's (out, in) layout
    bias:          (I,)
    tm:            token tile (rows of the flattened [B*S, H] matrix)
    tn:            optional intermediate-dim tile (multiple of 128 dividing I)
                   for VMEM-constrained configs; default keeps the full weight
                   resident in VMEM (best when it fits).
    use_bf16_matmul: cast matmul operands to bf16 (full MXU rate, ~1e-3 rel err
                   vs f32).  Set False for exact-f32 matmul.
    gelu_impl:     "erf" (exact, matches torch) or "tanh" (EUP-backed approx).
    out_dtype:     output dtype; default hidden_states.dtype (reference
                   semantics).  Pass jnp.bfloat16 to halve output HBM traffic.
    returns:       (B, S, I)
    """
    B, S, H = hidden_states.shape
    Hw, I = weight.shape
    assert Hw == H, "weight must be (hidden, intermediate)"
    M = B * S
    in_dtype = hidden_states.dtype
    out_dtype = in_dtype if out_dtype is None else out_dtype

    # Matmul operand dtype: bf16 feeds the MXU at full rate and halves the
    # resident-weight VMEM footprint; accumulation / GeLU stay in f32.
    mm_dtype = jnp.bfloat16 if use_bf16_matmul else in_dtype

    in_item = jnp.dtype(in_dtype).itemsize
    out_item = jnp.dtype(out_dtype).itemsize
    mm_item = jnp.dtype(mm_dtype).itemsize

    # Token-tile granularity must satisfy the sublane constraint of every
    # array sharing the tm axis (x in its original dtype, output in out_dtype).
    sublane = max(_sublane(in_dtype), _sublane(out_dtype))

    # Intermediate tile: default keeps the whole weight resident.  Pass tn
    # (multiple of 128 dividing I) to tile the intermediate dim on
    # VMEM-constrained configs (e.g. v7x with very large f32 weights).
    if tn is None or tn >= I:
        tn = I
    assert I % tn == 0 and (tn == I or tn % 128 == 0), \
        "tn must divide I and be a multiple of 128"
    weight_is_grid_invariant = (tn == I)

    # Token tile: big enough to amortize the ~0.35us per-grid-step overhead,
    # never larger than the (padded) token count.
    tm = max(sublane, min(int(tm), _round_up(M, sublane)))
    tm = _round_up(tm, sublane)
    # Megacore (v7x, 2 TCs) load balance: with tn == I all core parallelism
    # comes from the token axis, so make sure there are >= 2 token tiles when
    # there is enough work to split.
    if weight_is_grid_invariant and M >= 2 * 128:
        while tm > 128 and _round_up(M, tm) // tm < 2:
            tm = _round_up(tm // 2, sublane)
    Mp = _round_up(M, tm)                     # pad tokens up to a whole tile

    x2d = hidden_states.reshape(M, H)         # view-like reshape; dtype untouched
    if Mp != M:
        # Padded rows compute gelu(bias) on zero inputs and are sliced off
        # below — benign, do not reuse the padded rows.
        x2d = jnp.pad(x2d, ((0, Mp - M), (0, 0)))
    w = weight.astype(mm_dtype)               # one-time, small vs. the x stream
    b2d = bias.astype(jnp.float32).reshape(1, I)

    kernel = functools.partial(_bert_intermediate_kernel,
                               mm_dtype=mm_dtype, gelu_impl=gelu_impl)

    if weight_is_grid_invariant:
        # 1-D grid over token tiles; the weight/bias blocks never change, so a
        # single buffer halves their VMEM footprint.
        grid = (Mp // tm,)
        in_specs = [
            pl.BlockSpec((tm, H), lambda i: (i, 0)),                                # tokens
            pl.BlockSpec((H, I), lambda i: (0, 0), pipeline_mode=pl.Buffered(1)),   # weight
            pl.BlockSpec((1, I), lambda i: (0, 0), pipeline_mode=pl.Buffered(1)),   # bias
        ]
        out_spec = pl.BlockSpec((tm, I), lambda i: (i, 0))
        dim_sem = ("parallel",)
        w_bufs = 1
    else:
        # Weight-column axis OUTERMOST so each weight tile is DMA'd once and
        # the (smaller) token stream is what gets re-streamed.
        grid = (I // tn, Mp // tm)
        in_specs = [
            pl.BlockSpec((tm, H), lambda j, i: (i, 0)),    # tokens
            pl.BlockSpec((H, tn), lambda j, i: (0, j)),    # weight tile
            pl.BlockSpec((1, tn), lambda j, i: (0, j)),    # bias tile
        ]
        out_spec = pl.BlockSpec((tm, tn), lambda j, i: (i, j))
        dim_sem = ("parallel", "parallel")
        w_bufs = 2

    # VMEM budget: weight/bias (single- or double-buffered), double-buffered
    # x/out, the in-kernel bf16 copy of x, and f32 epilogue temporaries.
    vmem_est = (H * tn * mm_item * w_bufs          # resident weight
                + tn * 4 * w_bufs                  # bias
                + 2 * tm * H * in_item             # x double buffer
                + tm * H * mm_item                 # in-kernel bf16 x copy
                + 2 * tm * tn * out_item           # out double buffer
                + 2 * tm * tn * 4)                 # f32 acc / gelu temps
    # Cap at ~75% of physical per-core VMEM (48 MiB on v7x, 96 MiB on v5e/v6e),
    # and never above 100 MiB; no inflated floor.
    vmem_ceiling = min(_vmem_capacity_bytes() * 3 // 4, 100 * 1024 * 1024)
    vmem_limit = int(min(max(vmem_est * 3 // 2, 2 * 1024 * 1024), vmem_ceiling))

    cost = pl.CostEstimate(
        flops=2 * Mp * H * I,
        transcendentals=Mp * I,                    # one erf/tanh per output element
        bytes_accessed=int(M * H * in_item + H * I * mm_item
                           + I * 4 + M * I * out_item),
    )

    out = pl.pallas_call(
        kernel,
        out_shape=jax.ShapeDtypeStruct((Mp, I), out_dtype),
        grid_spec=pltpu.PrefetchScalarGridSpec(
            num_scalar_prefetch=0,
            grid=grid,
            in_specs=in_specs,
            out_specs=out_spec,
        ),
        compiler_params=pltpu.CompilerParams(
            dimension_semantics=dim_sem,
            vmem_limit_bytes=vmem_limit,
        ),
        cost_estimate=cost,
    )(x2d, w, b2d)

    if Mp != M:
        out = out[:M]
    return out.reshape(B, S, I)


if __name__ == "__main__":
    # Small BERT-like config: hidden_size=32, intermediate_size=128 (4x), gelu.
    batch, seq, hidden, intermediate = 2, 8, 32, 128

    key = jax.random.PRNGKey(0)
    k_x, k_w, k_b = jax.random.split(key, 3)

    hidden_states = jax.random.normal(k_x, (batch, seq, hidden), dtype=jnp.float32)
    # Deterministic init mimicking nn.Linear's uniform(-1/sqrt(H), 1/sqrt(H)).
    bound = 1.0 / math.sqrt(hidden)
    # Stored as (H, I) = transpose of PyTorch's (out, in) weight layout.
    weight = jax.random.uniform(k_w, (hidden, intermediate), jnp.float32, -bound, bound)
    bias = jax.random.uniform(k_b, (intermediate,), jnp.float32, -bound, bound)

    out = jax.block_until_ready(bert_intermediate(hidden_states, weight, bias))
    assert out.shape == (batch, seq, intermediate)
    assert out.dtype == hidden_states.dtype

    # Reference with the same bf16 matmul operands / f32 accumulation as the kernel.
    xb = hidden_states.reshape(-1, hidden).astype(jnp.bfloat16)
    wb = weight.astype(jnp.bfloat16)
    ref = jnp.dot(xb, wb, preferred_element_type=jnp.float32) + bias
    ref = ref * 0.5 * (1.0 + jax.lax.erf(ref * jnp.float32(_INV_SQRT2)))
    ref = ref.astype(hidden_states.dtype).reshape(batch, seq, intermediate)
    assert jnp.allclose(out, ref, atol=1e-4, rtol=1e-4), "mismatch vs bf16 reference"

    # Loose sanity check against the full-f32 PyTorch-equivalent forward pass
    # (bf16 matmul operands introduce ~1e-3 relative error).
    ref32 = hidden_states.reshape(-1, hidden) @ weight + bias
    ref32 = ref32 * 0.5 * (1.0 + jax.lax.erf(ref32 * jnp.float32(_INV_SQRT2)))
    ref32 = ref32.reshape(batch, seq, intermediate)
    assert jnp.allclose(out, ref32, atol=3e-2, rtol=3e-2), "mismatch vs f32 reference"

    # Exact-f32 matmul path (use_bf16_matmul=False) must match f32 reference tightly.
    out_f32 = jax.block_until_ready(
        bert_intermediate(hidden_states, weight, bias, use_bf16_matmul=False))
    assert jnp.allclose(out_f32, ref32, atol=1e-5, rtol=1e-5), "mismatch (f32 path)"

    print("KERNEL_OK")
</pallas_src>

<mosaic_0001>
module attributes {stable_mosaic.version = 11 : i64} {
  func.func @_bert_intermediate_kernel(%arg0: i32, %arg1: memref<16x32xf32, #tpu.memory_space<vmem>>, %arg2: memref<32x128xbf16, #tpu.memory_space<vmem>>, %arg3: memref<1x128xf32, #tpu.memory_space<vmem>>, %arg4: memref<16x128xf32, #tpu.memory_space<vmem>>) attributes {dimension_semantics = [#tpu.dimension_semantics<parallel>], iteration_bounds = array<i64: 1>, scalar_prefetch = 0 : i64, scratch_operands = 0 : i64, tpu.core_type = #tpu.core_type<tc>, window_params = [{transform_indices = @transform_0, window_bounds = array<i64: 16, 32>}, {pipeline_mode = #tpu.pipeline_mode<synchronous>, transform_indices = @transform_1, window_bounds = array<i64: 32, 128>}, {pipeline_mode = #tpu.pipeline_mode<synchronous>, transform_indices = @transform_2, window_bounds = array<i64: 1, 128>}, {transform_indices = @transform_3, window_bounds = array<i64: 16, 128>}]} {
    %c0 = arith.constant 0 : index
    %c0_0 = arith.constant 0 : index
    %0 = vector.load %arg1[%c0, %c0_0] : memref<16x32xf32, #tpu.memory_space<vmem>>, vector<16x32xf32>
    %1 = arith.truncf %0 : vector<16x32xf32> to vector<16x32xbf16>
    %c0_1 = arith.constant 0 : index
    %c0_2 = arith.constant 0 : index
    %2 = vector.load %arg2[%c0_1, %c0_2] : memref<32x128xbf16, #tpu.memory_space<vmem>>, vector<32x128xbf16>
    %cst = arith.constant dense<0.000000e+00> : vector<16x128xf32>
    %3 = tpu.matmul %1, %2, %cst {dimension_numbers = #tpu.dot_dimension_numbers<[1], [0], [0], [1], [0, 0, 1, 1], [], []>} : vector<16x32xbf16>, vector<32x128xbf16>, vector<16x128xf32> -> vector<16x128xf32>
    %c0_3 = arith.constant 0 : index
    %c0_4 = arith.constant 0 : index
    %4 = vector.load %arg3[%c0_3, %c0_4] : memref<1x128xf32, #tpu.memory_space<vmem>>, vector<1x128xf32>
    %5 = vector.broadcast %4 : vector<1x128xf32> to vector<16x128xf32>
    %6 = arith.addf %3, %5 : vector<16x128xf32>
    %cst_5 = arith.constant 5.000000e-01 : f32
    %7 = vector.broadcast %cst_5 : f32 to vector<16x128xf32>
    %8 = arith.mulf %6, %7 : vector<16x128xf32>
    %cst_6 = arith.constant 0.707106769 : f32
    %9 = vector.broadcast %cst_6 : f32 to vector<16x128xf32>
    %10 = arith.mulf %6, %9 : vector<16x128xf32>
    %11 = math.erf %10 : vector<16x128xf32>
    %cst_7 = arith.constant 1.000000e+00 : f32
    %12 = vector.broadcast %cst_7 : f32 to vector<16x128xf32>
    %13 = arith.addf %12, %11 : vector<16x128xf32>
    %14 = arith.mulf %8, %13 : vector<16x128xf32>
    %c0_8 = arith.constant 0 : index
    %c0_9 = arith.constant 0 : index
    %15 = vector.load %arg4[%c0_8, %c0_9] : memref<16x128xf32, #tpu.memory_space<vmem>>, vector<16x128xf32>
    tpu.vector_store %arg4[%c0_8, %c0_9], %14 {strides = array<i32>} : memref<16x128xf32, #tpu.memory_space<vmem>>, vector<16x128xf32>,
    return
  }
  func.func @transform_0(%arg0: i32) -> (i32, i32) {
    %c0_i32 = arith.constant 0 : i32
    %c0_i32_0 = arith.constant 0 : i32
    return %arg0, %c0_i32 : i32, i32
  }
  func.func @transform_1(%arg0: i32) -> (i32, i32) {
    %c0_i32 = arith.constant 0 : i32
    %c0_i32_0 = arith.constant 0 : i32
    %c0_i32_1 = arith.constant 0 : i32
    return %c0_i32, %c0_i32_0 : i32, i32
  }
  func.func @transform_2(%arg0: i32) -> (i32, i32) {
    %c0_i32 = arith.constant 0 : i32
    %c0_i32_0 = arith.constant 0 : i32
    %c0_i32_1 = arith.constant 0 : i32
    return %c0_i32, %c0_i32_0 : i32, i32
  }
  func.func @transform_3(%arg0: i32) -> (i32, i32) {
    %c0_i32 = arith.constant 0 : i32
    %c0_i32_0 = arith.constant 0 : i32
    return %arg0, %c0_i32 : i32, i32
  }
}

</mosaic_0001>

<llo_original>
// kernel: tpu_custom_call.1
$region0: #{tpu_custom_call.1}
  #allocation0 [shape = 'u32[]', space=smem, size = 0x4, offset = 0x4, fixed_abs, tag = 'smem constant byte address 0x4 - core index']
  #allocation1 [shape = 'u32[144,128]{1,0:T(1,128)}', space=vmem, size = 0x12000, scoped, tag = 'internal scratch']
  %s0 = inlined_call_operand.hbm [shape: f32[16,32], index: 0, kind: input, shape index: {}]
  %s1 = inlined_call_operand.hbm [shape: bf16[32,128], index: 1, kind: input, shape index: {}]
  %s2 = inlined_call_operand.vmem [shape: f32[1,128], index: 2, kind: input, shape index: {}]
  %s3 = inlined_call_operand.hbm [shape: f32[16,128], index: 3, kind: output, shape index: {}]
  %s4 = sld [smem:[#allocation0]]
  $region30: #{tpu_custom_call.1} parent=0
    _
  %s6 = ssub.s32 1, %s4
  %s7 = scalar_select 0, %s6, %s4
  $region1: #{tpu_custom_call.1} parent=0
    #allocation2 [shape = 'u8[8192]{0}', space=vmem, size = 0x2000, scoped, tag = 'input window, operand 0, single buffered']
    #allocation3 [shape = 's32[1]{0}', space=sflag, size = 0x4, scoped, tag = 'scoped memory for tpu_custom_call.1']
    #allocation4 [shape = 's32[1]{0}', space=sflag, size = 0x4, scoped, tag = 'scoped memory for tpu_custom_call.1']
    #allocation5 [shape = 'u8[8192]{0}', space=vmem, size = 0x2000, scoped, tag = 'input window, operand 1, single buffered']
    #allocation6 [shape = 's32[1]{0}', space=sflag, size = 0x4, scoped, tag = 'scoped memory for tpu_custom_call.1']
    #allocation7 [shape = 'u8[8192]{0}', space=vmem, size = 0x2000, scoped, tag = 'output window, operand 0, single buffered']
    %8 = vsyncpa [#allocation3], 0
    %9 = vsyncpa [#allocation6], 0
    %10 = vsyncpa [#allocation4], 0
    // Predicated region
    $region2: #{tpu_custom_call.1} parent=1 // pred_check
      _
    $region3: #{tpu_custom_call.1} parent=1 // pred_check_branch
      %12 = sbr.rel (0) target = $region5
    $region4: #{tpu_custom_call.1} parent=1 // pred_region
      %s14 = ssub.s32 256, 256
      %15 = vsyncadd [#allocation3], %s14
      %s16 = sshll.u32 [#allocation2], 4
      %s17 = int_to_ptr.vmem [resolvable:$true] %s16
      %22 = dma.hbm_to_vmem [thread:$0]  %s0, 256, %s17, [#allocation3], 128, 128, 8
    $region5: #{tpu_custom_call.1} parent=1 // pred_fallthru
      _
    // Predicated region
    $region6: #{tpu_custom_call.1} parent=1 // pred_check
      _
    $region7: #{tpu_custom_call.1} parent=1 // pred_check_branch
      %24 = sbr.rel (0) target = $region9
    $region8: #{tpu_custom_call.1} parent=1 // pred_region
      %s26 = ssub.s32 256, 256
      %27 = vsyncadd [#allocation6], %s26
      %s28 = sshll.u32 [#allocation5], 4
      %s29 = int_to_ptr.vmem [resolvable:$true] %s28
      %34 = dma.hbm_to_vmem [thread:$0]  %s1, 256, %s29, [#allocation6], 64, 64, 4
    $region9: #{tpu_custom_call.1} parent=1 // pred_fallthru
      _
    // Predicated region
    $region10: #{tpu_custom_call.1} parent=1 // pred_check
      _
    $region11: #{tpu_custom_call.1} parent=1 // pred_check_branch
      %36 = sbr.rel (0) target = $region13
    $region12: #{tpu_custom_call.1} parent=1 // pred_region
      _
    $region13: #{tpu_custom_call.1} parent=1 // pred_fallthru
      _
    // Predicated region
    $region14: #{tpu_custom_call.1} parent=1 // pred_check
      _
    $region15: #{tpu_custom_call.1} parent=1 // pred_check_branch
      %38 = sbr.rel (0) target = $region17
    $region16: #{tpu_custom_call.1} parent=1 // pred_region
      %39 = dma.done [#allocation3], 256
    $region17: #{tpu_custom_call.1} parent=1 // pred_fallthru
      _
    // Predicated region
    $region18: #{tpu_custom_call.1} parent=1 // pred_check
      _
    $region19: #{tpu_custom_call.1} parent=1 // pred_check_branch
      %41 = sbr.rel (0) target = $region21
    $region20: #{tpu_custom_call.1} parent=1 // pred_region
      %42 = dma.done [#allocation6], 256
    $region21: #{tpu_custom_call.1} parent=1 // pred_fallthru
      _
    %v44 = vld [vmem:[#allocation2] sm:$0xff]
    %v45 = vld [vmem:[#allocation2 + $0x8] sm:$0xff]
    %v46 = vpack.c.bf16 %v45, %v44
    %v47 = vld [vmem:[#allocation5] sm:$0xf]
    %v48 = vld [vmem:[#allocation5 + $0x4] sm:$0xf]
    %v49 = vld [vmem:[#allocation5 + $0x8] sm:$0xf]
    %v50 = vld [vmem:[#allocation5 + $0xc] sm:$0xf]
    %v51 = vld [vmem:[%s2] sm:$0x1]
    %v53 = vlaneseq
    %v54 = vshrl.u32 %v53, 7
    %v55 = vsub.s32 0, %v54
    %v56 = vrot.slane %v51, %v55
    %v62 = vunpack.c.l.b16 %v47
    %v63 = vunpack.c.l.b16 %v48
    %v64 = vunpack.c.l.b16 %v49
    %v65 = vunpack.c.l.b16 %v50
    %v66 = vpack.c.b16 %v63, %v62
    %v67 = vpack.c.b16 %v65, %v64
    %vm70 = vcmask 261120
    %v72 = vsel %vm70, %v46, 0
    %74 = vmatprep.subr.bf16.mxu0 0
    %75 = vmatpush1.bf16.msra.mxu0 0
    %76 = vmatprep.subr.bf16.mxu0 0
    %77 = vmatpush1.bf16.msra.mxu0 0
    %78 = vmatprep.subr.bf16.mxu0 0
    %79 = vmatpush1.bf16.msra.mxu0 0
    %80 = vmatprep.subr.bf16.mxu0 0
    %81 = vmatpush1.bf16.msra.mxu0 0
    %82 = vmatprep.subr.bf16.mxu0 0
    %83 = vmatpush1.bf16.msra.mxu0 0
    %84 = vmatprep.subr.bf16.mxu0 0
    %85 = vmatpush1.bf16.msra.mxu0 0
    %86 = vmatprep.subr.bf16.mxu0 0
    %87 = vmatpush1.bf16.msra.mxu0 %v67
    %88 = vmatprep.subr.bf16.mxu0 0
    %89 = vmatpush1.bf16.msra.mxu0 %v66
    %90 = vmatprep.subr.bf16.mxu0 0
    %91 = vmatpush2.bf16.msra.mxu0 0
    %92 = vmatprep.subr.bf16.mxu0 0
    %93 = vmatpush2.bf16.msra.mxu0 0
    %94 = vmatprep.subr.bf16.mxu0 0
    %95 = vmatpush2.bf16.msra.mxu0 0
    %96 = vmatprep.subr.bf16.mxu0 0
    %97 = vmatpush2.bf16.msra.mxu0 0
    %98 = vmatprep.subr.bf16.mxu0 0
    %99 = vmatpush2.bf16.msra.mxu0 0
    %100 = vmatprep.subr.bf16.mxu0 0
    %101 = vmatpush2.bf16.msra.mxu0 0
    %102 = vmatprep.subr.bf16.mxu0 0
    %103 = vmatpush2.bf16.msra.mxu0 0
    %104 = vmatprep.subr.bf16.mxu0 0
    %105 = vmatpush2.bf16.msra.mxu0 0
    %106 = vmatprep.mubr.bf16.mxu0 0
    %107 = vmatmul.mubr.bf16.gmra.mxu0 %v72
    %v108 = vpop.f32.mrf.mxu0
    %v109 = vadd.f32 %v56, %v108
    %v110 = vpop.f32.mrf.mxu0
    %v111 = vpop.f32.mrf.mxu0
    %v112 = vadd.f32 %v56, %v111
    %v113 = vpop.f32.mrf.mxu0
    %114 = vdwg.mxu0
    %v115 = vmul.f32 %v109, 0.5
    %v116 = vmul.f32 %v112, 0.5
    %v117 = vmul.f32 %v109, 0.70710677
    %v118 = vmul.f32 %v112, 0.70710677
    %v119 = verf.f32.pop %v117
    %v120 = verf.f32.pop %v118
    %v121 = vadd.f32 %v119, 1.0
    %v122 = vadd.f32 %v120, 1.0
    %v123 = vmul.f32 %v115, %v121
    %v124 = vmul.f32 %v116, %v122
    %125 = vst [vmem:[#allocation7] sm:$0xff] %v123
    %126 = vst [vmem:[#allocation7 + $0x8] sm:$0xff] %v124
    // Predicated region
    $region22: #{tpu_custom_call.1} parent=1 // pred_check
      _
    $region23: #{tpu_custom_call.1} parent=1 // pred_check_branch
      %128 = sbr.rel (0) target = $region25
    $region24: #{tpu_custom_call.1} parent=1 // pred_region
      %s130 = ssub.s32 256, 256
      %131 = vsyncadd [#allocation4], %s130
      %s132 = sshll.u32 [#allocation7], 4
      %s133 = int_to_ptr.vmem [resolvable:$true] %s132
      %138 = dma.vmem_to_hbm [thread:$0]  %s133, 256, %s3, [#allocation4], 128, 128, 8
    $region25: #{tpu_custom_call.1} parent=1 // pred_fallthru
      _
    // Predicated region
    $region26: #{tpu_custom_call.1} parent=1 // pred_check
      _
    $region27: #{tpu_custom_call.1} parent=1 // pred_check_branch
      %140 = sbr.rel (0) target = $region29
    $region28: #{tpu_custom_call.1} parent=1 // pred_region
      %141 = dma.done [#allocation4], 256
    $region29: #{tpu_custom_call.1} parent=1 // pred_fallthru
      _
    %142 = vsyncpa [#allocation3], 1
    %143 = vsyncpa [#allocation6], 1
    %144 = vsyncpa [#allocation4], 1

</llo_original>
